<compile_context>
chip_gen: v7x
topology: tpu7x:2x2x1
jax: 0.10.0
libtpu: 0.0.40
codegen_flags: <defaults>
</compile_context>

<pallas_src>
import jax
import jax.numpy as jnp
from jax.experimental import pallas as pl
from jax.experimental.pallas import tpu as pltpu

EMB_DIM = 64          # MoviePhi embedding / hidden width
TILE_B_DEFAULT = 1024  # batch tile (post one-hot fix, a few MiB per tile)


# ----------------------------------------------------------------------------
# Parameter init (deterministic, PyTorch-like fan_in uniform for Linear,
# N(0,1) for Embedding). Biases are stored as (1, out) so they broadcast.
# ----------------------------------------------------------------------------
def _init_linear(key, fan_in, fan_out):
    kw, kb = jax.random.split(key)
    bound = 1.0 / jnp.sqrt(jnp.float32(fan_in))
    w = jax.random.uniform(kw, (fan_in, fan_out), jnp.float32, -bound, bound)
    b = jax.random.uniform(kb, (1, fan_out), jnp.float32, -bound, bound)
    return w, b


def init_params(key, n_genres, n_actors, n_companies, n_directors):
    keys = iter(jax.random.split(key, 32))
    p = {}

    def deepset(prefix, vocab, out_dim):
        p[prefix + "_emb"] = jax.random.normal(next(keys), (vocab, EMB_DIM), jnp.float32)
        p[prefix + "_phi_w1"], p[prefix + "_phi_b1"] = _init_linear(next(keys), EMB_DIM, EMB_DIM)
        p[prefix + "_phi_w2"], p[prefix + "_phi_b2"] = _init_linear(next(keys), EMB_DIM, EMB_DIM)
        p[prefix + "_rho_w1"], p[prefix + "_rho_b1"] = _init_linear(next(keys), EMB_DIM, EMB_DIM)
        p[prefix + "_rho_w2"], p[prefix + "_rho_b2"] = _init_linear(next(keys), EMB_DIM, out_dim)

    deepset("g", n_genres, 32)      # deepset_genres    (output_dim=32)
    deepset("a", n_actors, 32)      # deepset_actors    (output_dim=32)
    deepset("c", n_companies, 16)   # deepset_companies (output_dim=16)
    p["d_emb"] = jax.random.normal(next(keys), (n_directors, 16), jnp.float32)

    head_dims = [(2 + 32 + 32 + 16 + 16, 128), (128, 128), (128, 64),
                 (64, 32), (32, 8), (8, 1)]
    for i, (fi, fo) in enumerate(head_dims, start=1):
        p[f"fc{i}_w"], p[f"fc{i}_b"] = _init_linear(next(keys), fi, fo)
    return p


# ----------------------------------------------------------------------------
# Packing: fold all linear-only paths into fc1 at pack time.
#   rho.fc2 @ W1_segment      -> (64, 128) per deepset
#   rho.fc2 bias @ W1_segment -> folded into b1
#   d_emb @ W1_director       -> (V_pad, 128)
# Vocab tables are zero-padded to a common 128-multiple; padded rows are never
# selected because all indices are < the real vocab size.
# ----------------------------------------------------------------------------
def _round_up(x, m):
    return (x + m - 1) // m * m


def _pad_rows(x, rows):
    return jnp.pad(x, ((0, rows - x.shape[0]), (0, 0)))


def pack_params(params):
    hp = jax.lax.Precision.HIGHEST
    vocabs = [params[p + "_emb"].shape[0] for p in "gac"] + [params["d_emb"].shape[0]]
    v_pad = _round_up(max(vocabs), 128)          # common lane-aligned vocab pad
    w1 = params["fc1_w"]                          # (98,128) rows: [budget,runtime,g,a,c,d]
    w1_g, w1_a, w1_c, w1_d = w1[2:34], w1[34:66], w1[66:82], w1[82:98]

    packed = {
        # inputs for the phi-table precompute kernel
        "emb": jnp.stack([_pad_rows(params[p + "_emb"], v_pad) for p in "gac"]),
        "pw1": jnp.stack([params[p + "_phi_w1"] for p in "gac"]),
        "pb1": jnp.stack([params[p + "_phi_b1"] for p in "gac"]),
        "pw2": jnp.stack([params[p + "_phi_w2"] for p in "gac"]),
        "pb2": jnp.stack([params[p + "_phi_b2"] for p in "gac"]),
        "rw1": jnp.stack([params[p + "_rho_w1"] for p in "gac"]),
        # hot-path weights (folded)
        "rb1": jnp.stack([params[p + "_rho_b1"] for p in "gac"]),          # (3,1,64)
        "rw2w1": jnp.stack([jnp.dot(params["g_rho_w2"], w1_g, precision=hp),
                            jnp.dot(params["a_rho_w2"], w1_a, precision=hp),
                            jnp.dot(params["c_rho_w2"], w1_c, precision=hp)]),  # (3,64,128)
        "d_fold": _pad_rows(jnp.dot(params["d_emb"], w1_d, precision=hp), v_pad),  # (Vp,128)
        "w1_br": jnp.pad(w1[0:2], ((0, 6), (0, 0))),                       # (8,128)
        "b1": (params["fc1_b"]
               + jnp.dot(params["g_rho_b2"], w1_g, precision=hp)
               + jnp.dot(params["a_rho_b2"], w1_a, precision=hp)
               + jnp.dot(params["c_rho_b2"], w1_c, precision=hp)),         # (1,128)
    }
    for i in range(2, 7):
        packed[f"w{i}"] = params[f"fc{i}_w"]
        packed[f"b{i}"] = params[f"fc{i}_b"]
    return packed


# ----------------------------------------------------------------------------
# Kernel 1: phi-table precompute (one-time, grid over the 3 deepsets).
# Computes tanh(fc2(tanh(fc1(tanh(emb))))) for every vocab row and folds rho.fc1
# into the table, so the hot path never touches the phi/rho_w1 weights.
# ----------------------------------------------------------------------------
def phi_table_kernel(emb_ref, w1_ref, b1_ref, w2_ref, b2_ref, rw1_ref, out_ref):
    f32 = jnp.float32
    h = jnp.tanh(emb_ref[0].astype(f32))                                      # (V, 64)
    h = jnp.tanh(jnp.dot(h, w1_ref[0], preferred_element_type=f32) + b1_ref[0])
    h = jnp.tanh(jnp.dot(h, w2_ref[0], preferred_element_type=f32) + b2_ref[0])
    out_ref[0] = jnp.dot(h, rw1_ref[0], preferred_element_type=f32)          # phi @ rho_w1


def compute_phi_tables(packed):
    n_sets, v_pad, _ = packed["emb"].shape
    blk = lambda i: (i, 0, 0)
    return pl.pallas_call(
        phi_table_kernel,
        out_shape=jax.ShapeDtypeStruct((n_sets, v_pad, EMB_DIM), jnp.float32),
        grid=(n_sets,),
        in_specs=[pl.BlockSpec((1, v_pad, EMB_DIM), blk),
                  pl.BlockSpec((1, EMB_DIM, EMB_DIM), blk),
                  pl.BlockSpec((1, 1, EMB_DIM), blk),
                  pl.BlockSpec((1, EMB_DIM, EMB_DIM), blk),
                  pl.BlockSpec((1, 1, EMB_DIM), blk),
                  pl.BlockSpec((1, EMB_DIM, EMB_DIM), blk)],
        out_specs=pl.BlockSpec((1, v_pad, EMB_DIM), blk),
        compiler_params=pltpu.CompilerParams(dimension_semantics=("parallel",)),
    )(packed["emb"], packed["pw1"], packed["pb1"], packed["pw2"], packed["pb2"],
      packed["rw1"])


def prepare(params):
    """One-time pack + phi precompute. Cache the result across forwards."""
    packed = pack_params(params)
    packed["phi_tab"] = compute_phi_tables(packed)     # (3, V_pad, 64), rho_w1 folded in
    for k in ("emb", "pw1", "pb1", "pw2", "pb2", "rw1"):
        del packed[k]                                  # only needed for the precompute
    return packed


# ----------------------------------------------------------------------------
# Kernel 2: batched hot path. Per batch tile:
#   counts/S  (2-D accumulation over the static set size, no 3-D one-hot)
#   h_k  = tanh(counts @ table2_k + rb1_k)             # (TB, 64)
#   fc1  = sum_k h_k @ (rw2_k @ W1seg_k) + onehot_d @ (d_emb @ W1_d)
#          + [budget,runtime] @ W1_br + b1_folded
#   then fc2..fc5 tanh, fc6 relu.
# TODO(synk): the VMEM-resident count@table design assumes small vocabs; a
# realistic 10k+ actor vocabulary needs a manual-DMA / scalar-prefetch gather.
# ----------------------------------------------------------------------------
def movie_kernel(
    br_ref, g_ref, a_ref, c_ref, d_ref,
    tab_ref, rb1_ref, rw2w1_ref, dfold_ref, w1br_ref, b1_ref,
    w2_ref, b2_ref, w3_ref, b3_ref, w4_ref, b4_ref, w5_ref, b5_ref, w6_ref, b6_ref,
    out_ref,
):
    f32 = jnp.float32
    tb = br_ref.shape[0]
    v_pad = tab_ref.shape[1]
    # Single hoisted 2-D lane iota shared by all four index sets.
    lane = jax.lax.broadcasted_iota(jnp.int32, (tb, v_pad), 1)

    def counts_mean(idx):                       # idx: (TB, S) int32, S small & static
        s = idx.shape[1]
        cnt = (idx[:, 0:1] == lane).astype(f32)
        for j in range(1, s):                   # static unroll over set positions
            cnt = cnt + (idx[:, j:j + 1] == lane).astype(f32)
        return cnt * (1.0 / s)                  # (TB, V_pad)

    def deepset(idx_ref, k):
        w = counts_mean(idx_ref[...])
        h = jnp.tanh(jnp.dot(w, tab_ref[k], preferred_element_type=f32) + rb1_ref[k])
        return jnp.dot(h, rw2w1_ref[k], preferred_element_type=f32)   # (TB, 128)

    d_onehot = counts_mean(d_ref[...])          # set size 1 -> plain one-hot

    h = (jnp.dot(br_ref[...], w1br_ref[...], preferred_element_type=f32)
         + deepset(g_ref, 0)
         + deepset(a_ref, 1)
         + deepset(c_ref, 2)
         + jnp.dot(d_onehot, dfold_ref[...], preferred_element_type=f32)
         + b1_ref[...])
    h = jnp.tanh(h)
    h = jnp.tanh(jnp.dot(h, w2_ref[...], preferred_element_type=f32) + b2_ref[...])
    h = jnp.tanh(jnp.dot(h, w3_ref[...], preferred_element_type=f32) + b3_ref[...])
    h = jnp.tanh(jnp.dot(h, w4_ref[...], preferred_element_type=f32) + b4_ref[...])
    h = jnp.tanh(jnp.dot(h, w5_ref[...], preferred_element_type=f32) + b5_ref[...])
    out_ref[...] = jnp.maximum(
        jnp.dot(h, w6_ref[...], preferred_element_type=f32) + b6_ref[...], 0.0)


# ----------------------------------------------------------------------------
# Forward wrapper: batch tiling + pallas_call. Weights are replicated blocks.
# ----------------------------------------------------------------------------
def _choose_tile_b(B, tile_b):
    if B <= 256:
        return B, B                              # single small tile, grid = 1
    # Aim for >= 2 tiles so v7x's 2 TensorCores can split the 'parallel' batch
    # axis; on v5e/v6e the grid is a serial loop and this is harmless.
    tile_b = min(tile_b, _round_up(-(-B // 2), 8))
    padded_b = _round_up(B, tile_b)
    return tile_b, padded_b


def movie_forward(packed, budget, runtime, genres, actors, companies, director,
                  tile_b=TILE_B_DEFAULT):
    B = budget.shape[0]
    tile_b, padded_b = _choose_tile_b(B, tile_b)

    def pad_b(x):
        return jnp.pad(x, ((0, padded_b - B),) + ((0, 0),) * (x.ndim - 1))

    # budget/runtime packed into an 8-wide, sublane-aligned slab matching w1_br.
    br = pad_b(jnp.concatenate([budget.astype(jnp.float32),
                                runtime.astype(jnp.float32),
                                jnp.zeros((B, 6), jnp.float32)], axis=1))
    g_idx = pad_b(genres.astype(jnp.int32))
    a_idx = pad_b(actors.astype(jnp.int32))
    c_idx = pad_b(companies.astype(jnp.int32))
    d_idx = pad_b(director.astype(jnp.int32).reshape(B, -1))

    tile = lambda i: (i, 0)

    def _rep(ndim):
        return lambda i: (0,) * ndim

    weights = [packed["phi_tab"], packed["rb1"], packed["rw2w1"], packed["d_fold"],
               packed["w1_br"], packed["b1"],
               packed["w2"], packed["b2"], packed["w3"], packed["b3"],
               packed["w4"], packed["b4"], packed["w5"], packed["b5"],
               packed["w6"], packed["b6"]]
    weight_specs = [pl.BlockSpec(w.shape, _rep(w.ndim)) for w in weights]

    out = pl.pallas_call(
        movie_kernel,
        out_shape=jax.ShapeDtypeStruct((padded_b, 1), jnp.float32),
        grid=(padded_b // tile_b,),
        in_specs=[pl.BlockSpec((tile_b, 8), tile),
                  pl.BlockSpec((tile_b, g_idx.shape[1]), tile),
                  pl.BlockSpec((tile_b, a_idx.shape[1]), tile),
                  pl.BlockSpec((tile_b, c_idx.shape[1]), tile),
                  pl.BlockSpec((tile_b, d_idx.shape[1]), tile)] + weight_specs,
        out_specs=pl.BlockSpec((tile_b, 1), tile),
        compiler_params=pltpu.CompilerParams(
            dimension_semantics=("parallel",),      # batch tiles shard across v7x's 2 TCs
            vmem_limit_bytes=32 * 1024 * 1024),     # explicit (covers v5e's 16 MiB default)
    )(br, g_idx, a_idx, c_idx, d_idx, *weights)
    return out[:B]


def movie_model(params, budget, runtime, genres, actors, companies, director,
                tile_b=TILE_B_DEFAULT):
    # Convenience wrapper; for repeated forwards, call prepare() once and reuse.
    packed = prepare(params)
    return movie_forward(packed, budget, runtime, genres, actors, companies,
                         director, tile_b=tile_b)


# ----------------------------------------------------------------------------
# Pure-JAX reference (mirrors the PyTorch forward) for a correctness check.
# ----------------------------------------------------------------------------
def movie_model_ref(params, budget, runtime, genres, actors, companies, director):
    hp = jax.lax.Precision.HIGHEST

    def linear(x, w, b):
        return jnp.dot(x, w, precision=hp) + b

    def deepset(prefix, idx):
        e = jnp.take(params[prefix + "_emb"], idx, axis=0)
        h = jnp.tanh(e)
        h = jnp.tanh(jnp.dot(h, params[prefix + "_phi_w1"], precision=hp)
                     + params[prefix + "_phi_b1"])
        h = jnp.tanh(jnp.dot(h, params[prefix + "_phi_w2"], precision=hp)
                     + params[prefix + "_phi_b2"])
        pooled = jnp.mean(h, axis=1)
        h = jnp.tanh(linear(pooled, params[prefix + "_rho_w1"], params[prefix + "_rho_b1"]))
        return linear(h, params[prefix + "_rho_w2"], params[prefix + "_rho_b2"])

    g = deepset("g", genres)
    a = deepset("a", actors)
    c = deepset("c", companies)
    d = jnp.take(params["d_emb"], director[:, 0], axis=0)
    enc = jnp.concatenate([budget, runtime, g, a, c, d], axis=1)
    h = jnp.tanh(linear(enc, params["fc1_w"], params["fc1_b"]))
    h = jnp.tanh(linear(h, params["fc2_w"], params["fc2_b"]))
    h = jnp.tanh(linear(h, params["fc3_w"], params["fc3_b"]))
    h = jnp.tanh(linear(h, params["fc4_w"], params["fc4_b"]))
    h = jnp.tanh(linear(h, params["fc5_w"], params["fc5_b"]))
    return jnp.maximum(linear(h, params["fc6_w"], params["fc6_b"]), 0.0)


if __name__ == "__main__":
    key = jax.random.PRNGKey(0)
    k_params, k_data = jax.random.split(key)

    n_genres, n_actors, n_companies, n_directors = 20, 50, 30, 40
    params = init_params(k_params, n_genres, n_actors, n_companies, n_directors)

    B, Sg, Sa, Sc = 2, 4, 6, 3
    kd = jax.random.split(k_data, 6)
    budget = jax.random.uniform(kd[0], (B, 1), jnp.float32)
    runtime = jax.random.uniform(kd[1], (B, 1), jnp.float32)
    genres = jax.random.randint(kd[2], (B, Sg), 0, n_genres)
    actors = jax.random.randint(kd[3], (B, Sa), 0, n_actors)
    companies = jax.random.randint(kd[4], (B, Sc), 0, n_companies)
    director = jax.random.randint(kd[5], (B, 1), 0, n_directors)

    packed = prepare(params)                       # one-time pack + phi precompute
    out = movie_forward(packed, budget, runtime, genres, actors, companies, director)
    out = jax.block_until_ready(out)
    assert out.shape == (B, 1) and out.dtype == jnp.float32

    ref = movie_model_ref(params, budget, runtime, genres, actors, companies, director)
    max_err = float(jnp.max(jnp.abs(out - ref)))
    assert max_err < 2e-3, f"max abs error vs reference: {max_err}"
    print("KERNEL_OK")
</pallas_src>

<mosaic_0001>
module attributes {stable_mosaic.version = 11 : i64} {
  func.func @phi_table_kernel(%arg0: i32, %arg1: memref<1x128x64xf32, #tpu.memory_space<vmem>>, %arg2: memref<1x64x64xf32, #tpu.memory_space<vmem>>, %arg3: memref<1x1x64xf32, #tpu.memory_space<vmem>>, %arg4: memref<1x64x64xf32, #tpu.memory_space<vmem>>, %arg5: memref<1x1x64xf32, #tpu.memory_space<vmem>>, %arg6: memref<1x64x64xf32, #tpu.memory_space<vmem>>, %arg7: memref<1x128x64xf32, #tpu.memory_space<vmem>>) attributes {dimension_semantics = [#tpu.dimension_semantics<parallel>], iteration_bounds = array<i64: 3>, scalar_prefetch = 0 : i64, scratch_operands = 0 : i64, tpu.core_type = #tpu.core_type<tc>, window_params = [{transform_indices = @transform_0, window_bounds = array<i64: 1, 128, 64>}, {transform_indices = @transform_1, window_bounds = array<i64: 1, 64, 64>}, {transform_indices = @transform_2, window_bounds = array<i64: 1, 1, 64>}, {transform_indices = @transform_3, window_bounds = array<i64: 1, 64, 64>}, {transform_indices = @transform_4, window_bounds = array<i64: 1, 1, 64>}, {transform_indices = @transform_5, window_bounds = array<i64: 1, 64, 64>}, {transform_indices = @transform_6, window_bounds = array<i64: 1, 128, 64>}]} {
    %c0 = arith.constant 0 : index
    %c0_0 = arith.constant 0 : index
    %c0_1 = arith.constant 0 : index
    %0 = vector.load %arg1[%c0, %c0_0, %c0_1] : memref<1x128x64xf32, #tpu.memory_space<vmem>>, vector<1x128x64xf32>
    %1 = vector.shape_cast %0 : vector<1x128x64xf32> to vector<128x64xf32>
    %2 = math.tanh %1 : vector<128x64xf32>
    %c0_2 = arith.constant 0 : index
    %c0_3 = arith.constant 0 : index
    %c0_4 = arith.constant 0 : index
    %3 = vector.load %arg2[%c0_2, %c0_3, %c0_4] : memref<1x64x64xf32, #tpu.memory_space<vmem>>, vector<1x64x64xf32>
    %4 = vector.shape_cast %3 : vector<1x64x64xf32> to vector<64x64xf32>
    %cst = arith.constant dense<0.000000e+00> : vector<128x64xf32>
    %5 = tpu.matmul %2, %4, %cst {dimension_numbers = #tpu.dot_dimension_numbers<[1], [0], [0], [1], [0, 0, 1, 1], [], []>} : vector<128x64xf32>, vector<64x64xf32>, vector<128x64xf32> -> vector<128x64xf32>
    %c0_5 = arith.constant 0 : index
    %c0_6 = arith.constant 0 : index
    %c0_7 = arith.constant 0 : index
    %6 = vector.load %arg3[%c0_5, %c0_6, %c0_7] : memref<1x1x64xf32, #tpu.memory_space<vmem>>, vector<1x1x64xf32>
    %7 = vector.shape_cast %6 : vector<1x1x64xf32> to vector<1x64xf32>
    %8 = vector.broadcast %7 : vector<1x64xf32> to vector<128x64xf32>
    %9 = arith.addf %5, %8 : vector<128x64xf32>
    %10 = math.tanh %9 : vector<128x64xf32>
    %c0_8 = arith.constant 0 : index
    %c0_9 = arith.constant 0 : index
    %c0_10 = arith.constant 0 : index
    %11 = vector.load %arg4[%c0_8, %c0_9, %c0_10] : memref<1x64x64xf32, #tpu.memory_space<vmem>>, vector<1x64x64xf32>
    %12 = vector.shape_cast %11 : vector<1x64x64xf32> to vector<64x64xf32>
    %cst_11 = arith.constant dense<0.000000e+00> : vector<128x64xf32>
    %13 = tpu.matmul %10, %12, %cst_11 {dimension_numbers = #tpu.dot_dimension_numbers<[1], [0], [0], [1], [0, 0, 1, 1], [], []>} : vector<128x64xf32>, vector<64x64xf32>, vector<128x64xf32> -> vector<128x64xf32>
    %c0_12 = arith.constant 0 : index
    %c0_13 = arith.constant 0 : index
    %c0_14 = arith.constant 0 : index
    %14 = vector.load %arg5[%c0_12, %c0_13, %c0_14] : memref<1x1x64xf32, #tpu.memory_space<vmem>>, vector<1x1x64xf32>
    %15 = vector.shape_cast %14 : vector<1x1x64xf32> to vector<1x64xf32>
    %16 = vector.broadcast %15 : vector<1x64xf32> to vector<128x64xf32>
    %17 = arith.addf %13, %16 : vector<128x64xf32>
    %18 = math.tanh %17 : vector<128x64xf32>
    %c0_15 = arith.constant 0 : index
    %c0_16 = arith.constant 0 : index
    %c0_17 = arith.constant 0 : index
    %19 = vector.load %arg6[%c0_15, %c0_16, %c0_17] : memref<1x64x64xf32, #tpu.memory_space<vmem>>, vector<1x64x64xf32>
    %20 = vector.shape_cast %19 : vector<1x64x64xf32> to vector<64x64xf32>
    %cst_18 = arith.constant dense<0.000000e+00> : vector<128x64xf32>
    %21 = tpu.matmul %18, %20, %cst_18 {dimension_numbers = #tpu.dot_dimension_numbers<[1], [0], [0], [1], [0, 0, 1, 1], [], []>} : vector<128x64xf32>, vector<64x64xf32>, vector<128x64xf32> -> vector<128x64xf32>
    %c0_19 = arith.constant 0 : index
    %c0_20 = arith.constant 0 : index
    %c0_21 = arith.constant 0 : index
    %22 = vector.load %arg7[%c0_19, %c0_20, %c0_21] : memref<1x128x64xf32, #tpu.memory_space<vmem>>, vector<1x128x64xf32>
    %23 = vector.shape_cast %22 : vector<1x128x64xf32> to vector<128x64xf32>
    %24 = vector.shape_cast %21 : vector<128x64xf32> to vector<1x128x64xf32>
    tpu.vector_store %arg7[%c0_19, %c0_20, %c0_21], %24 {strides = array<i32>} : memref<1x128x64xf32, #tpu.memory_space<vmem>>, vector<1x128x64xf32>,
    return
  }
  func.func @transform_0(%arg0: i32) -> (i32, i32, i32) {
    %c0_i32 = arith.constant 0 : i32
    %c0_i32_0 = arith.constant 0 : i32
    %c0_i32_1 = arith.constant 0 : i32
    return %arg0, %c0_i32, %c0_i32_0 : i32, i32, i32
  }
  func.func @transform_1(%arg0: i32) -> (i32, i32, i32) {
    %c0_i32 = arith.constant 0 : i32
    %c0_i32_0 = arith.constant 0 : i32
    %c0_i32_1 = arith.constant 0 : i32
    return %arg0, %c0_i32, %c0_i32_0 : i32, i32, i32
  }
  func.func @transform_2(%arg0: i32) -> (i32, i32, i32) {
    %c0_i32 = arith.constant 0 : i32
    %c0_i32_0 = arith.constant 0 : i32
    %c0_i32_1 = arith.constant 0 : i32
    return %arg0, %c0_i32, %c0_i32_0 : i32, i32, i32
  }
  func.func @transform_3(%arg0: i32) -> (i32, i32, i32) {
    %c0_i32 = arith.constant 0 : i32
    %c0_i32_0 = arith.constant 0 : i32
    %c0_i32_1 = arith.constant 0 : i32
    return %arg0, %c0_i32, %c0_i32_0 : i32, i32, i32
  }
  func.func @transform_4(%arg0: i32) -> (i32, i32, i32) {
    %c0_i32 = arith.constant 0 : i32
    %c0_i32_0 = arith.constant 0 : i32
    %c0_i32_1 = arith.constant 0 : i32
    return %arg0, %c0_i32, %c0_i32_0 : i32, i32, i32
  }
  func.func @transform_5(%arg0: i32) -> (i32, i32, i32) {
    %c0_i32 = arith.constant 0 : i32
    %c0_i32_0 = arith.constant 0 : i32
    %c0_i32_1 = arith.constant 0 : i32
    return %arg0, %c0_i32, %c0_i32_0 : i32, i32, i32
  }
  func.func @transform_6(%arg0: i32) -> (i32, i32, i32) {
    %c0_i32 = arith.constant 0 : i32
    %c0_i32_0 = arith.constant 0 : i32
    %c0_i32_1 = arith.constant 0 : i32
    return %arg0, %c0_i32, %c0_i32_0 : i32, i32, i32
  }
}

</mosaic_0001>

<llo_original>
// kernel: tpu_custom_call.1
$region0: #{tpu_custom_call.1}
  #allocation0 [shape = 'u32[]', space=smem, size = 0x4, offset = 0x4, fixed_abs, tag = 'smem constant byte address 0x4 - core index']
  #allocation1 [shape = 'u32[144,128]{1,0:T(1,128)}', space=vmem, size = 0x12000, scoped, tag = 'internal scratch']
  %s0 = inlined_call_operand.vmem [shape: f32[3,128,64], index: 0, kind: input, shape index: {}]
  %s1 = inlined_call_operand.vmem [shape: f32[3,64,64], index: 1, kind: input, shape index: {}]
  %s2 = inlined_call_operand.vmem [shape: f32[3,1,64], index: 2, kind: input, shape index: {}]
  %s3 = inlined_call_operand.vmem [shape: f32[3,64,64], index: 3, kind: input, shape index: {}]
  %s4 = inlined_call_operand.vmem [shape: f32[3,1,64], index: 4, kind: input, shape index: {}]
  %s5 = inlined_call_operand.vmem [shape: f32[3,64,64], index: 5, kind: input, shape index: {}]
  %s6 = inlined_call_operand.vmem [shape: f32[3,128,64], index: 6, kind: output, shape index: {}]
  %s7 = sld [smem:[#allocation0]]
  $region57: #{tpu_custom_call.1} parent=0
    _
  %s9 = ssub.s32 1, %s7
  %s10 = scalar_select 0, %s9, %s7
  loop: start=0, step=1, limit=5
  $region2: #{tpu_custom_call.1} parent=0 // loop_pre_header
    _
  $region3: #{tpu_custom_call.1} parent=0 // loop_header
    %s12 = sphi 0, %s16
    %p13 = scmp.ge.s32.totalorder %s12, 5
    %s22 = sphi 0, %s24
    %s25 = sphi 0, %s22
    %s26 = sphi 0, %s25
    %s42 = sphi 0, %s26
    %s48 = sphi 0, %s50
    %s51 = sphi 0, %s48
    %s52 = sphi 0, %s51
    %s68 = sphi 0, %s52
    %s74 = sphi 0, %s76
    %s77 = sphi 0, %s74
    %s78 = sphi 0, %s77
    %s94 = sphi 0, %s78
    %s100 = sphi 0, %s102
    %s103 = sphi 0, %s100
    %s104 = sphi 0, %s103
    %s120 = sphi 0, %s104
    %s126 = sphi 0, %s128
    %s129 = sphi 0, %s126
    %s130 = sphi 0, %s129
    %s146 = sphi 0, %s130
    %s152 = sphi 0, %s154
    %s155 = sphi 0, %s152
    %s156 = sphi 0, %s155
    %s172 = sphi 0, %s156
    %s178 = sphi 0, %s180
    %s181 = sphi 0, %s178
    %s182 = sphi 0, %s181
    %s198 = sphi 0, %s182
  $region4: #{tpu_custom_call.1} parent=0 // loop_header_branch
    %15 = sbr.rel (%p13) target = $region8
  $region5: #{tpu_custom_call.1} parent=0 // loop_body
    %s17 = ssub.s32 %s12, 1
    %s18 = ssub.s32 %s12, 2
    %s19 = sadd.s32 %s12, 1
    %s20 = ssub.s32 %s12, %s19
    %p21 = scmp.eq.s32.totalorder %s20, 0
    %s23 = sadd.s32 %s22, 1
    %s24 = scalar_select %p21, %s22, %s23
    %p27 = pneg %p21
    %p28 = scmp.eq.s32.totalorder %s12, 2
    %p29 = por %p27, %p28
    %p30 = scmp.ne.s32.totalorder %s22, %s25
    %p31 = scmp.eq.s32.totalorder %s12, 0
    %p32 = por %p30, %p31
    %p33 = scmp.ne.s32.totalorder %s22, %s25
    %p34 = scmp.eq.s32.totalorder %s17, 2
    %p35 = por %p33, %p34
    %p36 = scmp.ne.s32.totalorder %s25, %s26
    %p37 = scmp.eq.s32.totalorder %s17, 0
    %p38 = por %p36, %p37
    %p39 = scmp.ne.s32.totalorder %s25, %s26
    %p40 = scmp.eq.s32.totalorder %s18, 2
    %p41 = por %p39, %p40
    %p43 = scmp.ne.s32.totalorder %s26, %s42
    %p44 = scmp.eq.s32.totalorder %s18, 0
    %p45 = por %p43, %p44
    %s46 = ssub.s32 %s12, %s19
    %p47 = scmp.eq.s32.totalorder %s46, 0
    %s49 = sadd.s32 %s48, 1
    %s50 = scalar_select %p47, %s48, %s49
    %p53 = pneg %p47
    %p54 = scmp.eq.s32.totalorder %s12, 2
    %p55 = por %p53, %p54
    %p56 = scmp.ne.s32.totalorder %s48, %s51
    %p57 = scmp.eq.s32.totalorder %s12, 0
    %p58 = por %p56, %p57
    %p59 = scmp.ne.s32.totalorder %s48, %s51
    %p60 = scmp.eq.s32.totalorder %s17, 2
    %p61 = por %p59, %p60
    %p62 = scmp.ne.s32.totalorder %s51, %s52
    %p63 = scmp.eq.s32.totalorder %s17, 0
    %p64 = por %p62, %p63
    %p65 = scmp.ne.s32.totalorder %s51, %s52
    %p66 = scmp.eq.s32.totalorder %s18, 2
    %p67 = por %p65, %p66
    %p69 = scmp.ne.s32.totalorder %s52, %s68
    %p70 = scmp.eq.s32.totalorder %s18, 0
    %p71 = por %p69, %p70
    %s72 = ssub.s32 %s12, %s19
    %p73 = scmp.eq.s32.totalorder %s72, 0
    %s75 = sadd.s32 %s74, 1
    %s76 = scalar_select %p73, %s74, %s75
    %p79 = pneg %p73
    %p80 = scmp.eq.s32.totalorder %s12, 2
    %p81 = por %p79, %p80
    %p82 = scmp.ne.s32.totalorder %s74, %s77
    %p83 = scmp.eq.s32.totalorder %s12, 0
    %p84 = por %p82, %p83
    %p85 = scmp.ne.s32.totalorder %s74, %s77
    %p86 = scmp.eq.s32.totalorder %s17, 2
    %p87 = por %p85, %p86
    %p88 = scmp.ne.s32.totalorder %s77, %s78
    %p89 = scmp.eq.s32.totalorder %s17, 0
    %p90 = por %p88, %p89
    %p91 = scmp.ne.s32.totalorder %s77, %s78
    %p92 = scmp.eq.s32.totalorder %s18, 2
    %p93 = por %p91, %p92
    %p95 = scmp.ne.s32.totalorder %s78, %s94
    %p96 = scmp.eq.s32.totalorder %s18, 0
    %p97 = por %p95, %p96
    %s98 = ssub.s32 %s12, %s19
    %p99 = scmp.eq.s32.totalorder %s98, 0
    %s101 = sadd.s32 %s100, 1
    %s102 = scalar_select %p99, %s100, %s101
    %p105 = pneg %p99
    %p106 = scmp.eq.s32.totalorder %s12, 2
    %p107 = por %p105, %p106
    %p108 = scmp.ne.s32.totalorder %s100, %s103
    %p109 = scmp.eq.s32.totalorder %s12, 0
    %p110 = por %p108, %p109
    %p111 = scmp.ne.s32.totalorder %s100, %s103
    %p112 = scmp.eq.s32.totalorder %s17, 2
    %p113 = por %p111, %p112
    %p114 = scmp.ne.s32.totalorder %s103, %s104
    %p115 = scmp.eq.s32.totalorder %s17, 0
    %p116 = por %p114, %p115
    %p117 = scmp.ne.s32.totalorder %s103, %s104
    %p118 = scmp.eq.s32.totalorder %s18, 2
    %p119 = por %p117, %p118
    %p121 = scmp.ne.s32.totalorder %s104, %s120
    %p122 = scmp.eq.s32.totalorder %s18, 0
    %p123 = por %p121, %p122
    %s124 = ssub.s32 %s12, %s19
    %p125 = scmp.eq.s32.totalorder %s124, 0
    %s127 = sadd.s32 %s126, 1
    %s128 = scalar_select %p125, %s126, %s127
    %p131 = pneg %p125
    %p132 = scmp.eq.s32.totalorder %s12, 2
    %p133 = por %p131, %p132
    %p134 = scmp.ne.s32.totalorder %s126, %s129
    %p135 = scmp.eq.s32.totalorder %s12, 0
    %p136 = por %p134, %p135
    %p137 = scmp.ne.s32.totalorder %s126, %s129
    %p138 = scmp.eq.s32.totalorder %s17, 2
    %p139 = por %p137, %p138
    %p140 = scmp.ne.s32.totalorder %s129, %s130
    %p141 = scmp.eq.s32.totalorder %s17, 0
    %p142 = por %p140, %p141
    %p143 = scmp.ne.s32.totalorder %s129, %s130
    %p144 = scmp.eq.s32.totalorder %s18, 2
    %p145 = por %p143, %p144
    %p147 = scmp.ne.s32.totalorder %s130, %s146
    %p148 = scmp.eq.s32.totalorder %s18, 0
    %p149 = por %p147, %p148
    %s150 = ssub.s32 %s12, %s19
    %p151 = scmp.eq.s32.totalorder %s150, 0
    %s153 = sadd.s32 %s152, 1
    %s154 = scalar_select %p151, %s152, %s153
    %p157 = pneg %p151
    %p158 = scmp.eq.s32.totalorder %s12, 2
    %p159 = por %p157, %p158
    %p160 = scmp.ne.s32.totalorder %s152, %s155
    %p161 = scmp.eq.s32.totalorder %s12, 0
    %p162 = por %p160, %p161
    %p163 = scmp.ne.s32.totalorder %s152, %s155
    %p164 = scmp.eq.s32.totalorder %s17, 2
    %p165 = por %p163, %p164
    %p166 = scmp.ne.s32.totalorder %s155, %s156
    %p167 = scmp.eq.s32.totalorder %s17, 0
    %p168 = por %p166, %p167
    %p169 = scmp.ne.s32.totalorder %s155, %s156
    %p170 = scmp.eq.s32.totalorder %s18, 2
    %p171 = por %p169, %p170
    %p173 = scmp.ne.s32.totalorder %s156, %s172
    %p174 = scmp.eq.s32.totalorder %s18, 0
    %p175 = por %p173, %p174
    %s176 = ssub.s32 %s12, %s19
    %p177 = scmp.eq.s32.totalorder %s176, 0
    %s179 = sadd.s32 %s178, 1
    %s180 = scalar_select %p177, %s178, %s179
    %p183 = pneg %p177
    %p184 = scmp.eq.s32.totalorder %s12, 2
    %p185 = por %p183, %p184
    %p186 = scmp.ne.s32.totalorder %s178, %s181
    %p187 = scmp.eq.s32.totalorder %s12, 0
    %p188 = por %p186, %p187
    %p189 = scmp.ne.s32.totalorder %s178, %s181
    %p190 = scmp.eq.s32.totalorder %s17, 2
    %p191 = por %p189, %p190
    %p192 = scmp.ne.s32.totalorder %s181, %s182
    %p193 = scmp.eq.s32.totalorder %s17, 0
    %p194 = por %p192, %p193
    %p195 = scmp.ne.s32.totalorder %s181, %s182
    %p196 = scmp.eq.s32.totalorder %s18, 2
    %p197 = por %p195, %p196
    %p199 = scmp.ne.s32.totalorder %s182, %s198
    %p200 = scmp.eq.s32.totalorder %s18, 0
    %p201 = por %p199, %p200
    %p202 = scmp.le.s32.totalorder 1, %s12
    %p203 = scmp.lt.s32.totalorder %s12, 4
    %p204 = pnand %p202, %p203
    %p205 = pneg %p204
    // Predicated region
    $region9: #{tpu_custom_call.1} parent=5 // pred_check
      _
    $region10: #{tpu_custom_call.1} parent=5 // pred_check_branch
      %207 = sbr.rel (%p204) target = $region12
    $region11: #{tpu_custom_call.1} parent=5 // pred_region
      %s208 = ssub.s32 %s12, 1
    $region12: #{tpu_custom_call.1} parent=5 // pred_fallthru
      _
    %p209 = scmp.lt.s32.totalorder %s12, 3
    // Predicated region
    $region13: #{tpu_custom_call.1} parent=5 // pred_check
      %p210 = pneg %p209
    $region14: #{tpu_custom_call.1} parent=5 // pred_check_branch
      %212 = sbr.rel (%p210) target = $region16
    $region15: #{tpu_custom_call.1} parent=5 // pred_region
      // Predicated region
      $region17: #{tpu_custom_call.1} parent=15 // pred_check
        %p213 = pneg %p32
      $region18: #{tpu_custom_call.1} parent=15 // pred_check_branch
        %215 = sbr.rel (%p213) target = $region20
      $region19: #{tpu_custom_call.1} parent=15 // pred_region
        %p216 = scmp.lt.s32.totalorder %s12, 2
        %s217 = scalar_select %p216, %s12, 2
        %s218 = smul.addr %s217, 16
        %s219 = smul.addr %s218, 8
        %s220 = scalar_lea.vmem %s0, %s219
      $region20: #{tpu_custom_call.1} parent=15 // pred_fallthru
        _
      // Predicated region
      $region21: #{tpu_custom_call.1} parent=15 // pred_check
        %p221 = pneg %p58
      $region22: #{tpu_custom_call.1} parent=15 // pred_check_branch
        %223 = sbr.rel (%p221) target = $region24
      $region23: #{tpu_custom_call.1} parent=15 // pred_region
        %p224 = scmp.lt.s32.totalorder %s12, 2
        %s225 = scalar_select %p224, %s12, 2
        %s226 = smul.addr %s225, 8
        %s227 = smul.addr %s226, 8
        %s228 = scalar_lea.vmem %s1, %s227
      $region24: #{tpu_custom_call.1} parent=15 // pred_fallthru
        _
      // Predicated region
      $region25: #{tpu_custom_call.1} parent=15 // pred_check
        %p229 = pneg %p84
      $region26: #{tpu_custom_call.1} parent=15 // pred_check_branch
        %231 = sbr.rel (%p229) target = $region28
      $region27: #{tpu_custom_call.1} parent=15 // pred_region
        %p232 = scmp.lt.s32.totalorder %s12, 2
        %s233 = scalar_select %p232, %s12, 2
        %s234 = scalar_lea.vmem %s2, %s233
      $region28: #{tpu_custom_call.1} parent=15 // pred_fallthru
        _
      // Predicated region
      $region29: #{tpu_custom_call.1} parent=15 // pred_check
        %p235 = pneg %p110
      $region30: #{tpu_custom_call.1} parent=15 // pred_check_branch
        %237 = sbr.rel (%p235) target = $region32
      $region31: #{tpu_custom_call.1} parent=15 // pred_region
        %p238 = scmp.lt.s32.totalorder %s12, 2
        %s239 = scalar_select %p238, %s12, 2
        %s240 = smul.addr %s239, 8
        %s241 = smul.addr %s240, 8
        %s242 = scalar_lea.vmem %s3, %s241
      $region32: #{tpu_custom_call.1} parent=15 // pred_fallthru
        _
      // Predicated region
      $region33: #{tpu_custom_call.1} parent=15 // pred_check
        %p243 = pneg %p136
      $region34: #{tpu_custom_call.1} parent=15 // pred_check_branch
        %245 = sbr.rel (%p243) target = $region36
      $region35: #{tpu_custom_call.1} parent=15 // pred_region
        %p246 = scmp.lt.s32.totalorder %s12, 2
        %s247 = scalar_select %p246, %s12, 2
        %s248 = scalar_lea.vmem %s4, %s247
      $region36: #{tpu_custom_call.1} parent=15 // pred_fallthru
        _
      // Predicated region
      $region37: #{tpu_custom_call.1} parent=15 // pred_check
        %p249 = pneg %p162
      $region38: #{tpu_custom_call.1} parent=15 // pred_check_branch
        %251 = sbr.rel (%p249) target = $region40
      $region39: #{tpu_custom_call.1} parent=15 // pred_region
        %p252 = scmp.lt.s32.totalorder %s12, 2
        %s253 = scalar_select %p252, %s12, 2
        %s254 = smul.addr %s253, 8
        %s255 = smul.addr %s254, 8
        %s256 = scalar_lea.vmem %s5, %s255
      $region40: #{tpu_custom_call.1} parent=15 // pred_fallthru
        _
    $region16: #{tpu_custom_call.1} parent=5 // pred_fallthru
      _
    %p257 = scmp.le.s32.totalorder 1, %s12
    %p258 = scmp.lt.s32.totalorder %s12, 4
    %p259 = pnand %p257, %p258
    %p260 = pneg %p259
    // Predicated region
    $region41: #{tpu_custom_call.1} parent=5 // pred_check
      _
    $region42: #{tpu_custom_call.1} parent=5 // pred_check_branch
      %262 = sbr.rel (%p259) target = $region44
    $region43: #{tpu_custom_call.1} parent=5 // pred_region
      %s263 = ssub.s32 %s12, 1
      %p264 = scmp.lt.s32.totalorder %s17, 2
      %s265 = scalar_select %p264, %s17, 2
      %s266 = smul.addr %s265, 16
      %s267 = smul.addr %s266, 8
      %s268 = scalar_lea.vmem %s0, %s267
      %p269 = pneg %p38
      %p270 = pneg %p35
      %p271 = scmp.lt.s32.totalorder %s17, 2
      %s272 = scalar_select %p271, %s17, 2
      %s273 = smul.addr %s272, 8
      %s274 = smul.addr %s273, 8
      %s275 = scalar_lea.vmem %s1, %s274
      %p276 = pneg %p64
      %p277 = pneg %p61
      %p278 = scmp.lt.s32.totalorder %s17, 2
      %s279 = scalar_select %p278, %s17, 2
      %s280 = scalar_lea.vmem %s2, %s279
      %p281 = pneg %p90
      %p282 = pneg %p87
      %p283 = scmp.lt.s32.totalorder %s17, 2
      %s284 = scalar_select %p283, %s17, 2
      %s285 = smul.addr %s284, 8
      %s286 = smul.addr %s285, 8
      %s287 = scalar_lea.vmem %s3, %s286
      %p288 = pneg %p116
      %p289 = pneg %p113
      %p290 = scmp.lt.s32.totalorder %s17, 2
      %s291 = scalar_select %p290, %s17, 2
      %s292 = scalar_lea.vmem %s4, %s291
      %p293 = pneg %p142
      %p294 = pneg %p139
      %p295 = scmp.lt.s32.totalorder %s17, 2
      %s296 = scalar_select %p295, %s17, 2
      %s297 = smul.addr %s296, 8
      %s298 = smul.addr %s297, 8
      %s299 = scalar_lea.vmem %s5, %s298
      %p300 = pneg %p168
      %p301 = pneg %p165
      %p302 = pneg %p194
      %p303 = pneg %p191
      %p304 = scmp.lt.s32.totalorder %s17, 2
      %s305 = scalar_select %p304, %s17, 2
      %s306 = smul.addr %s305, 16
      %s307 = smul.addr %s306, 8
      %s308 = scalar_lea.vmem %s6, %s307
      %p309 = scmp.lt.s32.totalorder %s17, 2
      %s310 = scalar_select %p309, %s17, 2
      %s311 = smul.addr %s310, 16
      %s312 = smul.addr %s311, 8
      %s313 = scalar_lea.vmem %s0, %s312
      %p314 = scmp.lt.s32.totalorder %s17, 2
      %s315 = scalar_select %p314, %s17, 2
      %s316 = smul.addr %s315, 8
      %s317 = smul.addr %s316, 8
      %s318 = scalar_lea.vmem %s1, %s317
      %p319 = scmp.lt.s32.totalorder %s17, 2
      %s320 = scalar_select %p319, %s17, 2
      %s321 = scalar_lea.vmem %s2, %s320
      %p322 = scmp.lt.s32.totalorder %s17, 2
      %s323 = scalar_select %p322, %s17, 2
      %s324 = smul.addr %s323, 8
      %s325 = smul.addr %s324, 8
      %s326 = scalar_lea.vmem %s3, %s325
      %p327 = scmp.lt.s32.totalorder %s17, 2
      %s328 = scalar_select %p327, %s17, 2
      %s329 = scalar_lea.vmem %s4, %s328
      %p330 = scmp.lt.s32.totalorder %s17, 2
      %s331 = scalar_select %p330, %s17, 2
      %s332 = smul.addr %s331, 8
      %s333 = smul.addr %s332, 8
      %s334 = scalar_lea.vmem %s5, %s333
      %p335 = scmp.lt.s32.totalorder %s17, 2
      %s336 = scalar_select %p335, %s17, 2
      %s337 = smul.addr %s336, 16
      %s338 = smul.addr %s337, 8
      %s339 = scalar_lea.vmem %s6, %s338
      %v340 = vld [vmem:[%s313] sm:$0xff]
      %v341 = vld [vmem:[%s313 + $0x8] sm:$0xff]
      %v342 = vld [vmem:[%s313 + $0x10] sm:$0xff]
      %v343 = vld [vmem:[%s313 + $0x18] sm:$0xff]
      %v344 = vld [vmem:[%s313 + $0x20] sm:$0xff]
      %v345 = vld [vmem:[%s313 + $0x28] sm:$0xff]
      %v346 = vld [vmem:[%s313 + $0x30] sm:$0xff]
      %v347 = vld [vmem:[%s313 + $0x38] sm:$0xff]
      %v348 = vld [vmem:[%s313 + $0x40] sm:$0xff]
      %v349 = vld [vmem:[%s313 + $0x48] sm:$0xff]
      %v350 = vld [vmem:[%s313 + $0x50] sm:$0xff]
      %v351 = vld [vmem:[%s313 + $0x58] sm:$0xff]
      %v352 = vld [vmem:[%s313 + $0x60] sm:$0xff]
      %v353 = vld [vmem:[%s313 + $0x68] sm:$0xff]
      %v354 = vld [vmem:[%s313 + $0x70] sm:$0xff]
      %v355 = vld [vmem:[%s313 + $0x78] sm:$0xff]
      %v356 = vtanh.pop %v340
      %v357 = vtanh.pop %v341
      %v358 = vtanh.pop %v342
      %v359 = vtanh.pop %v343
      %v360 = vtanh.pop %v344
      %v361 = vtanh.pop %v345
      %v362 = vtanh.pop %v346
      %v363 = vtanh.pop %v347
      %v364 = vtanh.pop %v348
      %v365 = vtanh.pop %v349
      %v366 = vtanh.pop %v350
      %v367 = vtanh.pop %v351
      %v368 = vtanh.pop %v352
      %v369 = vtanh.pop %v353
      %v370 = vtanh.pop %v354
      %v371 = vtanh.pop %v355
      %v372 = vld [vmem:[%s318] sm:$0xff]
      %v373 = vld [vmem:[%s318 + $0x8] sm:$0xff]
      %v374 = vld [vmem:[%s318 + $0x10] sm:$0xff]
      %v375 = vld [vmem:[%s318 + $0x18] sm:$0xff]
      %v376 = vld [vmem:[%s318 + $0x20] sm:$0xff]
      %v377 = vld [vmem:[%s318 + $0x28] sm:$0xff]
      %v378 = vld [vmem:[%s318 + $0x30] sm:$0xff]
      %v379 = vld [vmem:[%s318 + $0x38] sm:$0xff]
      %v380 = vld [vmem:[%s321] sm:$0x1]
      %v382 = vlaneseq
      %v383 = vshrl.u32 %v382, 7
      %v384 = vsub.s32 0, %v383
      %v385 = vrot.slane %v380, %v384
      %vm387 = vcmask 523264
      %v389 = vsel %vm387, %v356, 0
      %v392 = vsel %vm387, %v357, 0
      %v395 = vsel %vm387, %v358, 0
      %v398 = vsel %vm387, %v359, 0
      %v401 = vsel %vm387, %v360, 0
      %v404 = vsel %vm387, %v361, 0
      %v407 = vsel %vm387, %v362, 0
      %v410 = vsel %vm387, %v363, 0
      %v413 = vsel %vm387, %v364, 0
      %v416 = vsel %vm387, %v365, 0
      %v419 = vsel %vm387, %v366, 0
      %v422 = vsel %vm387, %v367, 0
      %v425 = vsel %vm387, %v368, 0
      %v428 = vsel %vm387, %v369, 0
      %v431 = vsel %vm387, %v370, 0
      %v434 = vsel %vm387, %v371, 0
      %436 = vmatprep.subr.mxu0 0.0
      %437 = vmatpush1.msra.mxu0 %v372
      %438 = vmatprep.subr.mxu0 0.0
      %439 = vmatpush1.msra.mxu0 %v373
      %440 = vmatprep.subr.mxu0 0.0
      %441 = vmatpush1.msra.mxu0 %v374
      %442 = vmatprep.subr.mxu0 0.0
      %443 = vmatpush1.msra.mxu0 %v375
      %444 = vmatprep.subr.mxu0 0.0
      %445 = vmatpush1.msra.mxu0 %v376
      %446 = vmatprep.subr.mxu0 0.0
      %447 = vmatpush1.msra.mxu0 %v377
      %448 = vmatprep.subr.mxu0 0.0
      %449 = vmatpush1.msra.mxu0 %v378
      %450 = vmatprep.subr.mxu0 0.0
      %451 = vmatpush1.msra.mxu0 %v379
      %452 = vmatprep.subr.mxu0 0.0
      %453 = vmatpush1.msra.mxu0 0.0
      %454 = vmatprep.subr.mxu0 0.0
      %455 = vmatpush1.msra.mxu0 0.0
      %456 = vmatprep.subr.mxu0 0.0
      %457 = vmatpush1.msra.mxu0 0.0
      %458 = vmatprep.subr.mxu0 0.0
      %459 = vmatpush1.msra.mxu0 0.0
      %460 = vmatprep.subr.mxu0 0.0
      %461 = vmatpush1.msra.mxu0 0.0
      %462 = vmatprep.subr.mxu0 0.0
      %463 = vmatpush1.msra.mxu0 0.0
      %464 = vmatprep.subr.mxu0 0.0
      %465 = vmatpush1.msra.mxu0 0.0
      %466 = vmatprep.subr.mxu0 0.0
      %467 = vmatpush1.msra.mxu0 0.0
      %468 = vmatprep.subr.mxu0 0.0
      %469 = vmatpush1.msra.mxu0 0.0
      %470 = vmatprep.subr.mxu0 0.0
      %471 = vmatpush1.msra.mxu0 0.0
      %472 = vmatprep.subr.mxu0 0.0
      %473 = vmatpush1.msra.mxu0 0.0
      %474 = vmatprep.subr.mxu0 0.0
      %475 = vmatpush1.msra.mxu0 0.0
      %476 = vmatprep.subr.mxu0 0.0
      %477 = vmatpush1.msra.mxu0 0.0
      %478 = vmatprep.subr.mxu0 0.0
      %479 = vmatpush1.msra.mxu0 0.0
      %480 = vmatprep.subr.mxu0 0.0
      %481 = vmatpush1.msra.mxu0 0.0
      %482 = vmatprep.subr.mxu0 0.0
      %483 = vmatpush1.msra.mxu0 0.0
      %484 = vmatprep.subr.mxu0 0.0
      %485 = vmatpush1.msra.mxu0 0.0
      %486 = vmatprep.subr.mxu0 0.0
      %487 = vmatpush1.msra.mxu0 0.0
      %488 = vmatprep.subr.mxu0 0.0
      %489 = vmatpush1.msra.mxu0 0.0
      %490 = vmatprep.subr.mxu0 0.0
      %491 = vmatpush1.msra.mxu0 0.0
      %492 = vmatprep.subr.mxu0 0.0
      %493 = vmatpush1.msra.mxu0 0.0
      %494 = vmatprep.subr.mxu0 0.0
      %495 = vmatpush1.msra.mxu0 0.0
      %496 = vmatprep.subr.mxu0 0.0
      %497 = vmatpush1.msra.mxu0 0.0
      %498 = vmatprep.subr.mxu0 0.0
      %499 = vmatpush1.msra.mxu0 0.0
      %500 = vmatprep.mubr.f32.mxu0 0.0
      %501 = vmatmul.mubr.f32.gmra.mrb[0].mxu0 %v389
      %v502 = vpop.f32.mrb[0].mxu0
      %v503 = vadd.f32 %v385, %v502
      %v504 = vpop.f32.mrb[0].mxu0
      %505 = vmatprep.mubr.f32.mxu0 0.0
      %506 = vmatmul.mubr.f32.gmra.mrb[0].mxu0 %v392
      %v507 = vpop.f32.mrb[0].mxu0
      %v508 = vadd.f32 %v385, %v507
      %v509 = vpop.f32.mrb[0].mxu0
      %510 = vmatprep.mubr.f32.mxu0 0.0
      %511 = vmatmul.mubr.f32.gmra.mrb[0].mxu0 %v395
      %v512 = vpop.f32.mrb[0].mxu0
      %v513 = vadd.f32 %v385, %v512
      %v514 = vpop.f32.mrb[0].mxu0
      %515 = vmatprep.mubr.f32.mxu0 0.0
      %516 = vmatmul.mubr.f32.gmra.mrb[0].mxu0 %v398
      %v517 = vpop.f32.mrb[0].mxu0
      %v518 = vadd.f32 %v385, %v517
      %v519 = vpop.f32.mrb[0].mxu0
      %520 = vmatprep.mubr.f32.mxu0 0.0
      %521 = vmatmul.mubr.f32.gmra.mrb[0].mxu0 %v401
      %v522 = vpop.f32.mrb[0].mxu0
      %v523 = vadd.f32 %v385, %v522
      %v524 = vpop.f32.mrb[0].mxu0
      %525 = vmatprep.mubr.f32.mxu0 0.0
      %526 = vmatmul.mubr.f32.gmra.mrb[0].mxu0 %v404
      %v527 = vpop.f32.mrb[0].mxu0
      %v528 = vadd.f32 %v385, %v527
      %v529 = vpop.f32.mrb[0].mxu0
      %530 = vmatprep.mubr.f32.mxu0 0.0
      %531 = vmatmul.mubr.f32.gmra.mrb[0].mxu0 %v407
      %v532 = vpop.f32.mrb[0].mxu0
      %v533 = vadd.f32 %v385, %v532
      %v534 = vpop.f32.mrb[0].mxu0
      %535 = vmatprep.mubr.f32.mxu0 0.0
      %536 = vmatmul.mubr.f32.gmra.mrb[0].mxu0 %v410
      %v537 = vpop.f32.mrb[0].mxu0
      %v538 = vadd.f32 %v385, %v537
      %v539 = vpop.f32.mrb[0].mxu0
      %540 = vmatprep.mubr.f32.mxu0 0.0
      %541 = vmatmul.mubr.f32.gmra.mrb[0].mxu0 %v413
      %v542 = vpop.f32.mrb[0].mxu0
      %v543 = vadd.f32 %v385, %v542
      %v544 = vpop.f32.mrb[0].mxu0
      %545 = vmatprep.mubr.f32.mxu0 0.0
      %546 = vmatmul.mubr.f32.gmra.mrb[0].mxu0 %v416
      %v547 = vpop.f32.mrb[0].mxu0
      %v548 = vadd.f32 %v385, %v547
      %v549 = vpop.f32.mrb[0].mxu0
      %550 = vmatprep.mubr.f32.mxu0 0.0
      %551 = vmatmul.mubr.f32.gmra.mrb[0].mxu0 %v419
      %v552 = vpop.f32.mrb[0].mxu0
      %v553 = vadd.f32 %v385, %v552
      %v554 = vpop.f32.mrb[0].mxu0
      %555 = vmatprep.mubr.f32.mxu0 0.0
      %556 = vmatmul.mubr.f32.gmra.mrb[0].mxu0 %v422
      %v557 = vpop.f32.mrb[0].mxu0
      %v558 = vadd.f32 %v385, %v557
      %v559 = vpop.f32.mrb[0].mxu0
      %560 = vmatprep.mubr.f32.mxu0 0.0
      %561 = vmatmul.mubr.f32.gmra.mrb[0].mxu0 %v425
      %v562 = vpop.f32.mrb[0].mxu0
      %v563 = vadd.f32 %v385, %v562
      %v564 = vpop.f32.mrb[0].mxu0
      %565 = vmatprep.mubr.f32.mxu0 0.0
      %566 = vmatmul.mubr.f32.gmra.mrb[0].mxu0 %v428
      %v567 = vpop.f32.mrb[0].mxu0
      %v568 = vadd.f32 %v385, %v567
      %v569 = vpop.f32.mrb[0].mxu0
      %570 = vmatprep.mubr.f32.mxu0 0.0
      %571 = vmatmul.mubr.f32.gmra.mrb[0].mxu0 %v431
      %v572 = vpop.f32.mrb[0].mxu0
      %v573 = vadd.f32 %v385, %v572
      %v574 = vpop.f32.mrb[0].mxu0
      %575 = vmatprep.mubr.f32.mxu0 0.0
      %576 = vmatmul.mubr.f32.gmra.mrb[0].mxu0 %v434
      %v577 = vpop.f32.mrb[0].mxu0
      %v578 = vadd.f32 %v385, %v577
      %v579 = vpop.f32.mrb[0].mxu0
      %580 = vdwg.mxu0
      %v581 = vtanh.pop %v503
      %v582 = vtanh.pop %v508
      %v583 = vtanh.pop %v513
      %v584 = vtanh.pop %v518
      %v585 = vtanh.pop %v523
      %v586 = vtanh.pop %v528
      %v587 = vtanh.pop %v533
      %v588 = vtanh.pop %v538
      %v589 = vtanh.pop %v543
      %v590 = vtanh.pop %v548
      %v591 = vtanh.pop %v553
      %v592 = vtanh.pop %v558
      %v593 = vtanh.pop %v563
      %v594 = vtanh.pop %v568
      %v595 = vtanh.pop %v573
      %v596 = vtanh.pop %v578
      %v597 = vld [vmem:[%s326] sm:$0xff]
      %v598 = vld [vmem:[%s326 + $0x8] sm:$0xff]
      %v599 = vld [vmem:[%s326 + $0x10] sm:$0xff]
      %v600 = vld [vmem:[%s326 + $0x18] sm:$0xff]
      %v601 = vld [vmem:[%s326 + $0x20] sm:$0xff]
      %v602 = vld [vmem:[%s326 + $0x28] sm:$0xff]
      %v603 = vld [vmem:[%s326 + $0x30] sm:$0xff]
      %v604 = vld [vmem:[%s326 + $0x38] sm:$0xff]
      %v605 = vld [vmem:[%s329] sm:$0x1]
      %v607 = vlaneseq
      %v608 = vshrl.u32 %v607, 7
      %v609 = vsub.s32 0, %v608
      %v610 = vrot.slane %v605, %v609
      %v613 = vsel %vm387, %v581, 0
      %v616 = vsel %vm387, %v582, 0
      %v619 = vsel %vm387, %v583, 0
      %v622 = vsel %vm387, %v584, 0
      %v625 = vsel %vm387, %v585, 0
      %v628 = vsel %vm387, %v586, 0
      %v631 = vsel %vm387, %v587, 0
      %v634 = vsel %vm387, %v588, 0
      %v637 = vsel %vm387, %v589, 0
      %v640 = vsel %vm387, %v590, 0
      %v643 = vsel %vm387, %v591, 0
      %v646 = vsel %vm387, %v592, 0
      %v649 = vsel %vm387, %v593, 0
      %v652 = vsel %vm387, %v594, 0
      %v655 = vsel %vm387, %v595, 0
      %v658 = vsel %vm387, %v596, 0
      %660 = vmatprep.subr.mxu0 0.0
      %661 = vmatpush1.msra.mxu0 %v597
      %662 = vmatprep.subr.mxu0 0.0
      %663 = vmatpush1.msra.mxu0 %v598
      %664 = vmatprep.subr.mxu0 0.0
      %665 = vmatpush1.msra.mxu0 %v599
      %666 = vmatprep.subr.mxu0 0.0
      %667 = vmatpush1.msra.mxu0 %v600
      %668 = vmatprep.subr.mxu0 0.0
      %669 = vmatpush1.msra.mxu0 %v601
      %670 = vmatprep.subr.mxu0 0.0
      %671 = vmatpush1.msra.mxu0 %v602
      %672 = vmatprep.subr.mxu0 0.0
      %673 = vmatpush1.msra.mxu0 %v603
      %674 = vmatprep.subr.mxu0 0.0
      %675 = vmatpush1.msra.mxu0 %v604
      %676 = vmatprep.subr.mxu0 0.0
      %677 = vmatpush1.msra.mxu0 0.0
      %678 = vmatprep.subr.mxu0 0.0
      %679 = vmatpush1.msra.mxu0 0.0
      %680 = vmatprep.subr.mxu0 0.0
      %681 = vmatpush1.msra.mxu0 0.0
      %682 = vmatprep.subr.mxu0 0.0
      %683 = vmatpush1.msra.mxu0 0.0
      %684 = vmatprep.subr.mxu0 0.0
      %685 = vmatpush1.msra.mxu0 0.0
      %686 = vmatprep.subr.mxu0 0.0
      %687 = vmatpush1.msra.mxu0 0.0
      %688 = vmatprep.subr.mxu0 0.0
      %689 = vmatpush1.msra.mxu0 0.0
      %690 = vmatprep.subr.mxu0 0.0
      %691 = vmatpush1.msra.mxu0 0.0
      %692 = vmatprep.subr.mxu0 0.0
      %693 = vmatpush1.msra.mxu0 0.0
      %694 = vmatprep.subr.mxu0 0.0
      %695 = vmatpush1.msra.mxu0 0.0
      %696 = vmatprep.subr.mxu0 0.0
      %697 = vmatpush1.msra.mxu0 0.0
      %698 = vmatprep.subr.mxu0 0.0
      %699 = vmatpush1.msra.mxu0 0.0
      %700 = vmatprep.subr.mxu0 0.0
      %701 = vmatpush1.msra.mxu0 0.0
      %702 = vmatprep.subr.mxu0 0.0
      %703 = vmatpush1.msra.mxu0 0.0
      %704 = vmatprep.subr.mxu0 0.0
      %705 = vmatpush1.msra.mxu0 0.0
      %706 = vmatprep.subr.mxu0 0.0
      %707 = vmatpush1.msra.mxu0 0.0
      %708 = vmatprep.subr.mxu0 0.0
      %709 = vmatpush1.msra.mxu0 0.0
      %710 = vmatprep.subr.mxu0 0.0
      %711 = vmatpush1.msra.mxu0 0.0
      %712 = vmatprep.subr.mxu0 0.0
      %713 = vmatpush1.msra.mxu0 0.0
      %714 = vmatprep.subr.mxu0 0.0
      %715 = vmatpush1.msra.mxu0 0.0
      %716 = vmatprep.subr.mxu0 0.0
      %717 = vmatpush1.msra.mxu0 0.0
      %718 = vmatprep.subr.mxu0 0.0
      %719 = vmatpush1.msra.mxu0 0.0
      %720 = vmatprep.subr.mxu0 0.0
      %721 = vmatpush1.msra.mxu0 0.0
      %722 = vmatprep.subr.mxu0 0.0
      %723 = vmatpush1.msra.mxu0 0.0
      %724 = vmatprep.mubr.f32.mxu0 0.0
      %725 = vmatmul.mubr.f32.gmra.mrb[0].mxu0 %v613
      %v726 = vpop.f32.mrb[0].mxu0
      %v727 = vadd.f32 %v610, %v726
      %v728 = vpop.f32.mrb[0].mxu0
      %729 = vmatprep.mubr.f32.mxu0 0.0
      %730 = vmatmul.mubr.f32.gmra.mrb[0].mxu0 %v616
      %v731 = vpop.f32.mrb[0].mxu0
      %v732 = vadd.f32 %v610, %v731
      %v733 = vpop.f32.mrb[0].mxu0
      %734 = vmatprep.mubr.f32.mxu0 0.0
      %735 = vmatmul.mubr.f32.gmra.mrb[0].mxu0 %v619
      %v736 = vpop.f32.mrb[0].mxu0
      %v737 = vadd.f32 %v610, %v736
      %v738 = vpop.f32.mrb[0].mxu0
      %739 = vmatprep.mubr.f32.mxu0 0.0
      %740 = vmatmul.mubr.f32.gmra.mrb[0].mxu0 %v622
      %v741 = vpop.f32.mrb[0].mxu0
      %v742 = vadd.f32 %v610, %v741
      %v743 = vpop.f32.mrb[0].mxu0
      %744 = vmatprep.mubr.f32.mxu0 0.0
      %745 = vmatmul.mubr.f32.gmra.mrb[0].mxu0 %v625
      %v746 = vpop.f32.mrb[0].mxu0
      %v747 = vadd.f32 %v610, %v746
      %v748 = vpop.f32.mrb[0].mxu0
      %749 = vmatprep.mubr.f32.mxu0 0.0
      %750 = vmatmul.mubr.f32.gmra.mrb[0].mxu0 %v628
      %v751 = vpop.f32.mrb[0].mxu0
      %v752 = vadd.f32 %v610, %v751
      %v753 = vpop.f32.mrb[0].mxu0
      %754 = vmatprep.mubr.f32.mxu0 0.0
      %755 = vmatmul.mubr.f32.gmra.mrb[0].mxu0 %v631
      %v756 = vpop.f32.mrb[0].mxu0
      %v757 = vadd.f32 %v610, %v756
      %v758 = vpop.f32.mrb[0].mxu0
      %759 = vmatprep.mubr.f32.mxu0 0.0
      %760 = vmatmul.mubr.f32.gmra.mrb[0].mxu0 %v634
      %v761 = vpop.f32.mrb[0].mxu0
      %v762 = vadd.f32 %v610, %v761
      %v763 = vpop.f32.mrb[0].mxu0
      %764 = vmatprep.mubr.f32.mxu0 0.0
      %765 = vmatmul.mubr.f32.gmra.mrb[0].mxu0 %v637
      %v766 = vpop.f32.mrb[0].mxu0
      %v767 = vadd.f32 %v610, %v766
      %v768 = vpop.f32.mrb[0].mxu0
      %769 = vmatprep.mubr.f32.mxu0 0.0
      %770 = vmatmul.mubr.f32.gmra.mrb[0].mxu0 %v640
      %v771 = vpop.f32.mrb[0].mxu0
      %v772 = vadd.f32 %v610, %v771
      %v773 = vpop.f32.mrb[0].mxu0
      %774 = vmatprep.mubr.f32.mxu0 0.0
      %775 = vmatmul.mubr.f32.gmra.mrb[0].mxu0 %v643
      %v776 = vpop.f32.mrb[0].mxu0
      %v777 = vadd.f32 %v610, %v776
      %v778 = vpop.f32.mrb[0].mxu0
      %779 = vmatprep.mubr.f32.mxu0 0.0
      %780 = vmatmul.mubr.f32.gmra.mrb[0].mxu0 %v646
      %v781 = vpop.f32.mrb[0].mxu0
      %v782 = vadd.f32 %v610, %v781
      %v783 = vpop.f32.mrb[0].mxu0
      %784 = vmatprep.mubr.f32.mxu0 0.0
      %785 = vmatmul.mubr.f32.gmra.mrb[0].mxu0 %v649
      %v786 = vpop.f32.mrb[0].mxu0
      %v787 = vadd.f32 %v610, %v786
      %v788 = vpop.f32.mrb[0].mxu0
      %789 = vmatprep.mubr.f32.mxu0 0.0
      %790 = vmatmul.mubr.f32.gmra.mrb[0].mxu0 %v652
      %v791 = vpop.f32.mrb[0].mxu0
      %v792 = vadd.f32 %v610, %v791
      %v793 = vpop.f32.mrb[0].mxu0
      %794 = vmatprep.mubr.f32.mxu0 0.0
      %795 = vmatmul.mubr.f32.gmra.mrb[0].mxu0 %v655
      %v796 = vpop.f32.mrb[0].mxu0
      %v797 = vadd.f32 %v610, %v796
      %v798 = vpop.f32.mrb[0].mxu0
      %799 = vmatprep.mubr.f32.mxu0 0.0
      %800 = vmatmul.mubr.f32.gmra.mrb[0].mxu0 %v658
      %v801 = vpop.f32.mrb[0].mxu0
      %v802 = vadd.f32 %v610, %v801
      %v803 = vpop.f32.mrb[0].mxu0
      %804 = vdwg.mxu0
      %v805 = vtanh.pop %v727
      %v806 = vtanh.pop %v732
      %v807 = vtanh.pop %v737
      %v808 = vtanh.pop %v742
      %v809 = vtanh.pop %v747
      %v810 = vtanh.pop %v752
      %v811 = vtanh.pop %v757
      %v812 = vtanh.pop %v762
      %v813 = vtanh.pop %v767
      %v814 = vtanh.pop %v772
      %v815 = vtanh.pop %v777
      %v816 = vtanh.pop %v782
      %v817 = vtanh.pop %v787
      %v818 = vtanh.pop %v792
      %v819 = vtanh.pop %v797
      %v820 = vtanh.pop %v802
      %v821 = vld [vmem:[%s334] sm:$0xff]
      %v822 = vld [vmem:[%s334 + $0x8] sm:$0xff]
      %v823 = vld [vmem:[%s334 + $0x10] sm:$0xff]
      %v824 = vld [vmem:[%s334 + $0x18] sm:$0xff]
      %v825 = vld [vmem:[%s334 + $0x20] sm:$0xff]
      %v826 = vld [vmem:[%s334 + $0x28] sm:$0xff]
      %v827 = vld [vmem:[%s334 + $0x30] sm:$0xff]
      %v828 = vld [vmem:[%s334 + $0x38] sm:$0xff]
      %v830 = vsel %vm387, %v805, 0
      %v833 = vsel %vm387, %v806, 0
      %v836 = vsel %vm387, %v807, 0
      %v839 = vsel %vm387, %v808, 0
      %v842 = vsel %vm387, %v809, 0
      %v845 = vsel %vm387, %v810, 0
      %v848 = vsel %vm387, %v811, 0
      %v851 = vsel %vm387, %v812, 0
      %v854 = vsel %vm387, %v813, 0
      %v857 = vsel %vm387, %v814, 0
      %v860 = vsel %vm387, %v815, 0
      %v863 = vsel %vm387, %v816, 0
      %v866 = vsel %vm387, %v817, 0
      %v869 = vsel %vm387, %v818, 0
      %v872 = vsel %vm387, %v819, 0
      %v875 = vsel %vm387, %v820, 0
      %877 = vmatprep.subr.mxu0 0.0
      %878 = vmatpush1.msra.mxu0 %v821
      %879 = vmatprep.subr.mxu0 0.0
      %880 = vmatpush1.msra.mxu0 %v822
      %881 = vmatprep.subr.mxu0 0.0
      %882 = vmatpush1.msra.mxu0 %v823
      %883 = vmatprep.subr.mxu0 0.0
      %884 = vmatpush1.msra.mxu0 %v824
      %885 = vmatprep.subr.mxu0 0.0
      %886 = vmatpush1.msra.mxu0 %v825
      %887 = vmatprep.subr.mxu0 0.0
      %888 = vmatpush1.msra.mxu0 %v826
      %889 = vmatprep.subr.mxu0 0.0
      %890 = vmatpush1.msra.mxu0 %v827
      %891 = vmatprep.subr.mxu0 0.0
      %892 = vmatpush1.msra.mxu0 %v828
      %893 = vmatprep.subr.mxu0 0.0
      %894 = vmatpush1.msra.mxu0 0.0
      %895 = vmatprep.subr.mxu0 0.0
      %896 = vmatpush1.msra.mxu0 0.0
      %897 = vmatprep.subr.mxu0 0.0
      %898 = vmatpush1.msra.mxu0 0.0
      %899 = vmatprep.subr.mxu0 0.0
      %900 = vmatpush1.msra.mxu0 0.0
      %901 = vmatprep.subr.mxu0 0.0
      %902 = vmatpush1.msra.mxu0 0.0
      %903 = vmatprep.subr.mxu0 0.0
      %904 = vmatpush1.msra.mxu0 0.0
      %905 = vmatprep.subr.mxu0 0.0
      %906 = vmatpush1.msra.mxu0 0.0
      %907 = vmatprep.subr.mxu0 0.0
      %908 = vmatpush1.msra.mxu0 0.0
      %909 = vmatprep.subr.mxu0 0.0
      %910 = vmatpush1.msra.mxu0 0.0
      %911 = vmatprep.subr.mxu0 0.0
      %912 = vmatpush1.msra.mxu0 0.0
      %913 = vmatprep.subr.mxu0 0.0
      %914 = vmatpush1.msra.mxu0 0.0
      %915 = vmatprep.subr.mxu0 0.0
      %916 = vmatpush1.msra.mxu0 0.0
      %917 = vmatprep.subr.mxu0 0.0
      %918 = vmatpush1.msra.mxu0 0.0
      %919 = vmatprep.subr.mxu0 0.0
      %920 = vmatpush1.msra.mxu0 0.0
      %921 = vmatprep.subr.mxu0 0.0
      %922 = vmatpush1.msra.mxu0 0.0
      %923 = vmatprep.subr.mxu0 0.0
      %924 = vmatpush1.msra.mxu0 0.0
      %925 = vmatprep.subr.mxu0 0.0
      %926 = vmatpush1.msra.mxu0 0.0
      %927 = vmatprep.subr.mxu0 0.0
      %928 = vmatpush1.msra.mxu0 0.0
      %929 = vmatprep.subr.mxu0 0.0
      %930 = vmatpush1.msra.mxu0 0.0
      %931 = vmatprep.subr.mxu0 0.0
      %932 = vmatpush1.msra.mxu0 0.0
      %933 = vmatprep.subr.mxu0 0.0
      %934 = vmatpush1.msra.mxu0 0.0
      %935 = vmatprep.subr.mxu0 0.0
      %936 = vmatpush1.msra.mxu0 0.0
      %937 = vmatprep.subr.mxu0 0.0
      %938 = vmatpush1.msra.mxu0 0.0
      %939 = vmatprep.subr.mxu0 0.0
      %940 = vmatpush1.msra.mxu0 0.0
      %941 = vmatprep.mubr.f32.mxu0 0.0
      %942 = vmatmul.mubr.f32.gmra.mrb[0].mxu0 %v830
      %v943 = vpop.f32.mrb[0].mxu0
      %v944 = vadd.f32 0.0, %v943
      %v945 = vpop.f32.mrb[0].mxu0
      %946 = vmatprep.mubr.f32.mxu0 0.0
      %947 = vmatmul.mubr.f32.gmra.mrb[0].mxu0 %v833
      %v948 = vpop.f32.mrb[0].mxu0
      %v949 = vadd.f32 0.0, %v948
      %v950 = vpop.f32.mrb[0].mxu0
      %951 = vmatprep.mubr.f32.mxu0 0.0
      %952 = vmatmul.mubr.f32.gmra.mrb[0].mxu0 %v836
      %v953 = vpop.f32.mrb[0].mxu0
      %v954 = vadd.f32 0.0, %v953
      %v955 = vpop.f32.mrb[0].mxu0
      %956 = vmatprep.mubr.f32.mxu0 0.0
      %957 = vmatmul.mubr.f32.gmra.mrb[0].mxu0 %v839
      %v958 = vpop.f32.mrb[0].mxu0
      %v959 = vadd.f32 0.0, %v958
      %v960 = vpop.f32.mrb[0].mxu0
      %961 = vmatprep.mubr.f32.mxu0 0.0
      %962 = vmatmul.mubr.f32.gmra.mrb[0].mxu0 %v842
      %v963 = vpop.f32.mrb[0].mxu0
      %v964 = vadd.f32 0.0, %v963
      %v965 = vpop.f32.mrb[0].mxu0
      %966 = vmatprep.mubr.f32.mxu0 0.0
      %967 = vmatmul.mubr.f32.gmra.mrb[0].mxu0 %v845
      %v968 = vpop.f32.mrb[0].mxu0
      %v969 = vadd.f32 0.0, %v968
      %v970 = vpop.f32.mrb[0].mxu0
      %971 = vmatprep.mubr.f32.mxu0 0.0
      %972 = vmatmul.mubr.f32.gmra.mrb[0].mxu0 %v848
      %v973 = vpop.f32.mrb[0].mxu0
      %v974 = vadd.f32 0.0, %v973
      %v975 = vpop.f32.mrb[0].mxu0
      %976 = vmatprep.mubr.f32.mxu0 0.0
      %977 = vmatmul.mubr.f32.gmra.mrb[0].mxu0 %v851
      %v978 = vpop.f32.mrb[0].mxu0
      %v979 = vadd.f32 0.0, %v978
      %v980 = vpop.f32.mrb[0].mxu0
      %981 = vmatprep.mubr.f32.mxu0 0.0
      %982 = vmatmul.mubr.f32.gmra.mrb[0].mxu0 %v854
      %v983 = vpop.f32.mrb[0].mxu0
      %v984 = vadd.f32 0.0, %v983
      %v985 = vpop.f32.mrb[0].mxu0
      %986 = vmatprep.mubr.f32.mxu0 0.0
      %987 = vmatmul.mubr.f32.gmra.mrb[0].mxu0 %v857
      %v988 = vpop.f32.mrb[0].mxu0
      %v989 = vadd.f32 0.0, %v988
      %v990 = vpop.f32.mrb[0].mxu0
      %991 = vmatprep.mubr.f32.mxu0 0.0
      %992 = vmatmul.mubr.f32.gmra.mrb[0].mxu0 %v860
      %v993 = vpop.f32.mrb[0].mxu0
      %v994 = vadd.f32 0.0, %v993
      %v995 = vpop.f32.mrb[0].mxu0
      %996 = vmatprep.mubr.f32.mxu0 0.0
      %997 = vmatmul.mubr.f32.gmra.mrb[0].mxu0 %v863
      %v998 = vpop.f32.mrb[0].mxu0
      %v999 = vadd.f32 0.0, %v998
      %v1000 = vpop.f32.mrb[0].mxu0
      %1001 = vmatprep.mubr.f32.mxu0 0.0
      %1002 = vmatmul.mubr.f32.gmra.mrb[0].mxu0 %v866
      %v1003 = vpop.f32.mrb[0].mxu0
      %v1004 = vadd.f32 0.0, %v1003
      %v1005 = vpop.f32.mrb[0].mxu0
      %1006 = vmatprep.mubr.f32.mxu0 0.0
      %1007 = vmatmul.mubr.f32.gmra.mrb[0].mxu0 %v869
      %v1008 = vpop.f32.mrb[0].mxu0
      %v1009 = vadd.f32 0.0, %v1008
      %v1010 = vpop.f32.mrb[0].mxu0
      %1011 = vmatprep.mubr.f32.mxu0 0.0
      %1012 = vmatmul.mubr.f32.gmra.mrb[0].mxu0 %v872
      %v1013 = vpop.f32.mrb[0].mxu0
      %v1014 = vadd.f32 0.0, %v1013
      %v1015 = vpop.f32.mrb[0].mxu0
      %1016 = vmatprep.mubr.f32.mxu0 0.0
      %1017 = vmatmul.mubr.f32.gmra.mrb[0].mxu0 %v875
      %v1018 = vpop.f32.mrb[0].mxu0
      %v1019 = vadd.f32 0.0, %v1018
      %v1020 = vpop.f32.mrb[0].mxu0
      %1021 = vdwg.mxu0
      %1022 = vst.msk [vmem:[%s339] sm:$0xff] %vm387, %v944
      %1023 = vst.msk [vmem:[%s339 + $0x8] sm:$0xff] %vm387, %v949
      %1024 = vst.msk [vmem:[%s339 + $0x10] sm:$0xff] %vm387, %v954
      %1025 = vst.msk [vmem:[%s339 + $0x18] sm:$0xff] %vm387, %v959
      %1026 = vst.msk [vmem:[%s339 + $0x20] sm:$0xff] %vm387, %v964
      %1027 = vst.msk [vmem:[%s339 + $0x28] sm:$0xff] %vm387, %v969
      %1028 = vst.msk [vmem:[%s339 + $0x30] sm:$0xff] %vm387, %v974
      %1029 = vst.msk [vmem:[%s339 + $0x38] sm:$0xff] %vm387, %v979
      %1030 = vst.msk [vmem:[%s339 + $0x40] sm:$0xff] %vm387, %v984
      %1031 = vst.msk [vmem:[%s339 + $0x48] sm:$0xff] %vm387, %v989
      %1032 = vst.msk [vmem:[%s339 + $0x50] sm:$0xff] %vm387, %v994
      %1033 = vst.msk [vmem:[%s339 + $0x58] sm:$0xff] %vm387, %v999
      %1034 = vst.msk [vmem:[%s339 + $0x60] sm:$0xff] %vm387, %v1004
      %1035 = vst.msk [vmem:[%s339 + $0x68] sm:$0xff] %vm387, %v1009
      %1036 = vst.msk [vmem:[%s339 + $0x70] sm:$0xff] %vm387, %v1014
      %1037 = vst.msk [vmem:[%s339 + $0x78] sm:$0xff] %vm387, %v1019
      %p1038 = scmp.lt.s32.totalorder %s17, 2
      %s1039 = scalar_select %p1038, %s17, 2
      %s1040 = smul.addr %s1039, 16
      %s1041 = smul.addr %s1040, 8
      %s1042 = scalar_lea.vmem %s6, %s1041
      // Predicated region
      $region45: #{tpu_custom_call.1} parent=43 // pred_check
        %p1043 = pneg %p191
      $region46: #{tpu_custom_call.1} parent=43 // pred_check_branch
        %1045 = sbr.rel (%p1043) target = $region48
      $region47: #{tpu_custom_call.1} parent=43 // pred_region
        _
      $region48: #{tpu_custom_call.1} parent=43 // pred_fallthru
        _
    $region44: #{tpu_custom_call.1} parent=5 // pred_fallthru
      _
    %p1046 = scmp.le.s32.totalorder 2, %s12
    // Predicated region
    $region49: #{tpu_custom_call.1} parent=5 // pred_check
      %p1047 = pneg %p1046
    $region50: #{tpu_custom_call.1} parent=5 // pred_check_branch
      %1049 = sbr.rel (%p1047) target = $region52
    $region51: #{tpu_custom_call.1} parent=5 // pred_region
      %s1050 = ssub.s32 %s12, 2
      // Predicated region
      $region53: #{tpu_custom_call.1} parent=51 // pred_check
        %p1051 = pneg %p197
      $region54: #{tpu_custom_call.1} parent=51 // pred_check_branch
        %1053 = sbr.rel (%p1051) target = $region56
      $region55: #{tpu_custom_call.1} parent=51 // pred_region
        %p1054 = scmp.lt.s32.totalorder %s18, 2
        %s1055 = scalar_select %p1054, %s18, 2
        %s1056 = smul.addr %s1055, 16
        %s1057 = smul.addr %s1056, 8
        %s1058 = scalar_lea.vmem %s6, %s1057
      $region56: #{tpu_custom_call.1} parent=51 // pred_fallthru
        _
    $region52: #{tpu_custom_call.1} parent=5 // pred_fallthru
      _
  $region6: #{tpu_custom_call.1} parent=0 // loop_footer
    %s16 = sadd.s32 1, %s12
  $region7: #{tpu_custom_call.1} parent=0 // loop_footer_branch
    %11 = sbr.rel target = $region3
  $region8: #{tpu_custom_call.1} parent=0 // loop_exit
    _

</llo_original>
